<compile_context>
chip_gen: v5e
topology: v5e:2x2
jax: 0.10.0
libtpu: 0.0.40
codegen_flags: <defaults>
</compile_context>

<pallas_src>
import functools

import jax
import jax.numpy as jnp
from jax.experimental import pallas as pl
from jax.experimental.pallas import tpu as pltpu


def _round_up(n, m):
    return ((n + m - 1) // m) * m


def _pad2d(a, rows, cols):
    return jnp.pad(a, ((0, rows - a.shape[0]), (0, cols - a.shape[1])))


def linearnet_kernel(x_ref, w1_ref, b1_ref, w2_ref, b2_ref, w3_ref, b3_ref, o_ref):
    # MXU matmuls take bf16 inputs and accumulate in f32; elementwise (bias/ReLU) stays f32.
    x = x_ref[...]
    if x.dtype != jnp.bfloat16:          # no-op if the caller already streams bf16
        x = x.astype(jnp.bfloat16)

    # Layer 1: x @ W1 + b1, ReLU   (K = obs, unpadded; N = HID_P, zero-padded lanes stay 0)
    h1 = jnp.dot(x, w1_ref[...], preferred_element_type=jnp.float32)
    h1 = jnp.maximum(h1 + b1_ref[...], 0.0)

    # Layer 2: h1 @ W2 + b2, ReLU
    h2 = jnp.dot(h1.astype(jnp.bfloat16), w2_ref[...], preferred_element_type=jnp.float32)
    h2 = jnp.maximum(h2 + b2_ref[...], 0.0)

    # Layer 3: h2 @ W3 + b3  (logits, no activation; output last dim = n_actions, unpadded)
    logits = jnp.dot(h2.astype(jnp.bfloat16), w3_ref[...], preferred_element_type=jnp.float32)
    o_ref[...] = (logits + b3_ref[...]).astype(o_ref.dtype)


def prepare_params(params):
    """One-time weight prep: pad hidden dims to 128 lanes, cast weights to bf16.

    K of layer 1 (obs) and N of layer 3 (n_actions) are left unpadded so x and the logits
    never need wrapper pad/slice passes. Zero-padded W columns + zero-padded biases keep the
    padded hidden lanes exactly 0 through ReLU, and zero-padded W rows contribute nothing.
    """
    w1, b1, w2, b2, w3, b3 = params
    obs, hid = w1.shape
    n_actions = w3.shape[1]
    hid_p = _round_up(hid, 128)

    w1_p = _pad2d(w1, obs, hid_p).astype(jnp.bfloat16)
    w2_p = _pad2d(w2, hid_p, hid_p).astype(jnp.bfloat16)
    w3_p = _pad2d(w3, hid_p, n_actions).astype(jnp.bfloat16)
    b1_p = _pad2d(jnp.reshape(b1, (1, -1)), 1, hid_p).astype(jnp.float32)
    b2_p = _pad2d(jnp.reshape(b2, (1, -1)), 1, hid_p).astype(jnp.float32)
    b3_p = jnp.reshape(b3, (1, -1)).astype(jnp.float32)
    return (w1_p, b1_p, w2_p, b2_p, w3_p, b3_p)


def _choose_tb(B, tb):
    """Batch tile: big (default 1024) to amortize the ~0.35us per-grid-step overhead, a
    multiple of 16 for bf16 packing, and small enough that medium batches still get >=2 grid
    steps (v7x has 2 TensorCores sharing the "parallel" batch axis)."""
    if B <= 256:
        return B  # single block; block dim == full array dim is always a legal BlockSpec
    t = min(tb, _round_up(pl.cdiv(B, 2), 16))
    return max(16, (t // 16) * 16)


def _vmem_limit_bytes(TB, obs, hid_p, n_actions, x_itemsize):
    est = 0
    est += 2 * TB * obs * x_itemsize                      # double-buffered x tile
    est += 2 * TB * n_actions * 4                         # double-buffered output tile (f32)
    est += (obs * hid_p + hid_p * hid_p + hid_p * n_actions) * 2   # resident bf16 weights
    est += (2 * hid_p + n_actions) * 4                    # resident f32 biases
    est += 3 * TB * hid_p * 4                             # live f32 h1/h2/logits
    est += 2 * TB * hid_p * 2                             # bf16 copies fed to the MXU
    return int(min(max(2 * est, 32 * 1024 * 1024), 48 * 1024 * 1024))


@functools.partial(jax.jit, static_argnames=("tb",))
def linearnet_forward(x, prepared_params, tb=1024):
    """Fused 3-layer MLP forward.

    x: (B, obs), f32 or bf16 (bf16 halves streamed HBM bytes; fuse the cast at x's producer —
    do NOT add a standalone cast pass). Returns (B, n_actions) f32 logits.
    Note: for tiny batches (B <~ a few hundred) a plain jnp forward is cheaper than any kernel
    launch; the Pallas path is kept unconditional here for demonstration.
    """
    w1, b1, w2, b2, w3, b3 = prepared_params
    B, obs = x.shape
    hid_p = w1.shape[1]
    n_actions = w3.shape[1]

    TB = _choose_tb(B, tb)
    grid = (pl.cdiv(B, TB),)  # ragged last block is handled by Pallas; no batch padding of x

    out = pl.pallas_call(
        linearnet_kernel,
        out_shape=jax.ShapeDtypeStruct((B, n_actions), jnp.float32),
        grid_spec=pl.GridSpec(
            grid=grid,
            in_specs=[
                pl.BlockSpec((TB, obs), lambda i: (i, 0)),          # x tile, streamed per step
                pl.BlockSpec((obs, hid_p), lambda i: (0, 0)),       # W1, resident (K unpadded)
                pl.BlockSpec((1, hid_p), lambda i: (0, 0)),         # b1, resident
                pl.BlockSpec((hid_p, hid_p), lambda i: (0, 0)),     # W2, resident
                pl.BlockSpec((1, hid_p), lambda i: (0, 0)),         # b2, resident
                pl.BlockSpec((hid_p, n_actions), lambda i: (0, 0)), # W3, resident (N unpadded)
                pl.BlockSpec((1, n_actions), lambda i: (0, 0)),     # b3, resident
            ],
            out_specs=pl.BlockSpec((TB, n_actions), lambda i: (i, 0)),  # unpadded logits tile
        ),
        compiler_params=pltpu.CompilerParams(
            dimension_semantics=("parallel",),  # batch axis -> both TCs on v7x
            vmem_limit_bytes=_vmem_limit_bytes(TB, obs, hid_p, n_actions, x.dtype.itemsize),
        ),
    )(x, w1, b1, w2, b2, w3, b3)
    return out


def init_linear(key, fan_in, fan_out):
    """Deterministic init mirroring PyTorch nn.Linear default: U(-1/sqrt(fan_in), 1/sqrt(fan_in)).
    Weight stored as (fan_in, fan_out), i.e. already transposed for x @ W."""
    kw, kb = jax.random.split(key)
    bound = 1.0 / jnp.sqrt(jnp.float32(fan_in))
    w = jax.random.uniform(kw, (fan_in, fan_out), jnp.float32, -bound, bound)
    b = jax.random.uniform(kb, (1, fan_out), jnp.float32, -bound, bound)
    return w, b


if __name__ == "__main__":
    # Small shapes consistent with the module's forward.
    batch = 8
    observation_size = 32
    hidden_size = 64
    n_actions = 16

    key = jax.random.PRNGKey(0)
    k_x, k1, k2, k3 = jax.random.split(key, 4)

    x = jax.random.normal(k_x, (batch, observation_size), jnp.float32)
    w1, b1 = init_linear(k1, observation_size, hidden_size)
    w2, b2 = init_linear(k2, hidden_size, hidden_size)
    w3, b3 = init_linear(k3, hidden_size, n_actions)

    prepared = prepare_params((w1, b1, w2, b2, w3, b3))

    # Stream x as bf16 (in production this cast fuses with x's producer).
    x_bf = x.astype(jnp.bfloat16)

    logits = linearnet_forward(x_bf, prepared)
    logits = jax.block_until_ready(logits)

    # Pure-JAX f32 reference of the same semantics (bf16 inputs to matmuls -> looser tolerance).
    x_ref = x_bf.astype(jnp.float32)
    h = jnp.maximum(x_ref @ w1 + b1, 0.0)
    h = jnp.maximum(h @ w2 + b2, 0.0)
    ref = h @ w3 + b3

    assert logits.shape == (batch, n_actions)
    assert jnp.allclose(logits, ref, atol=2e-2, rtol=2e-2), (
        float(jnp.max(jnp.abs(logits - ref)))
    )

    print("KERNEL_OK")
</pallas_src>

<mosaic_0001>
module attributes {stable_mosaic.version = 11 : i64} {
  func.func @linearnet_kernel(%arg0: i32, %arg1: memref<8x32xbf16, #tpu.memory_space<vmem>>, %arg2: memref<32x128xbf16, #tpu.memory_space<vmem>>, %arg3: memref<1x128xf32, #tpu.memory_space<vmem>>, %arg4: memref<128x128xbf16, #tpu.memory_space<vmem>>, %arg5: memref<1x128xf32, #tpu.memory_space<vmem>>, %arg6: memref<128x16xbf16, #tpu.memory_space<vmem>>, %arg7: memref<1x16xf32, #tpu.memory_space<vmem>>, %arg8: memref<8x16xf32, #tpu.memory_space<vmem>>) attributes {dimension_semantics = [#tpu.dimension_semantics<parallel>], iteration_bounds = array<i64: 1>, scalar_prefetch = 0 : i64, scratch_operands = 0 : i64, tpu.core_type = #tpu.core_type<tc>, window_params = [{transform_indices = @transform_0, window_bounds = array<i64: 8, 32>}, {pipeline_mode = #tpu.pipeline_mode<synchronous>, transform_indices = @transform_1, window_bounds = array<i64: 32, 128>}, {pipeline_mode = #tpu.pipeline_mode<synchronous>, transform_indices = @transform_2, window_bounds = array<i64: 1, 128>}, {pipeline_mode = #tpu.pipeline_mode<synchronous>, transform_indices = @transform_3, window_bounds = array<i64: 128, 128>}, {pipeline_mode = #tpu.pipeline_mode<synchronous>, transform_indices = @transform_4, window_bounds = array<i64: 1, 128>}, {pipeline_mode = #tpu.pipeline_mode<synchronous>, transform_indices = @transform_5, window_bounds = array<i64: 128, 16>}, {pipeline_mode = #tpu.pipeline_mode<synchronous>, transform_indices = @transform_6, window_bounds = array<i64: 1, 16>}, {transform_indices = @transform_7, window_bounds = array<i64: 8, 16>}]} {
    %c0 = arith.constant 0 : index
    %c0_0 = arith.constant 0 : index
    %0 = vector.load %arg1[%c0, %c0_0] : memref<8x32xbf16, #tpu.memory_space<vmem>>, vector<8x32xbf16>
    %c0_1 = arith.constant 0 : index
    %c0_2 = arith.constant 0 : index
    %1 = vector.load %arg2[%c0_1, %c0_2] : memref<32x128xbf16, #tpu.memory_space<vmem>>, vector<32x128xbf16>
    %cst = arith.constant dense<0.000000e+00> : vector<8x128xf32>
    %2 = tpu.matmul %0, %1, %cst {dimension_numbers = #tpu.dot_dimension_numbers<[1], [0], [0], [1], [0, 0, 1, 1], [], []>} : vector<8x32xbf16>, vector<32x128xbf16>, vector<8x128xf32> -> vector<8x128xf32>
    %c0_3 = arith.constant 0 : index
    %c0_4 = arith.constant 0 : index
    %3 = vector.load %arg3[%c0_3, %c0_4] : memref<1x128xf32, #tpu.memory_space<vmem>>, vector<1x128xf32>
    %4 = vector.broadcast %3 : vector<1x128xf32> to vector<8x128xf32>
    %5 = arith.addf %2, %4 : vector<8x128xf32>
    %cst_5 = arith.constant 0.000000e+00 : f32
    %6 = vector.broadcast %cst_5 : f32 to vector<8x128xf32>
    %7 = arith.maximumf %5, %6 : vector<8x128xf32>
    %8 = arith.truncf %7 : vector<8x128xf32> to vector<8x128xbf16>
    %c0_6 = arith.constant 0 : index
    %c0_7 = arith.constant 0 : index
    %9 = vector.load %arg4[%c0_6, %c0_7] : memref<128x128xbf16, #tpu.memory_space<vmem>>, vector<128x128xbf16>
    %cst_8 = arith.constant dense<0.000000e+00> : vector<8x128xf32>
    %10 = tpu.matmul %8, %9, %cst_8 {dimension_numbers = #tpu.dot_dimension_numbers<[1], [0], [0], [1], [0, 0, 1, 1], [], []>} : vector<8x128xbf16>, vector<128x128xbf16>, vector<8x128xf32> -> vector<8x128xf32>
    %c0_9 = arith.constant 0 : index
    %c0_10 = arith.constant 0 : index
    %11 = vector.load %arg5[%c0_9, %c0_10] : memref<1x128xf32, #tpu.memory_space<vmem>>, vector<1x128xf32>
    %12 = vector.broadcast %11 : vector<1x128xf32> to vector<8x128xf32>
    %13 = arith.addf %10, %12 : vector<8x128xf32>
    %cst_11 = arith.constant 0.000000e+00 : f32
    %14 = vector.broadcast %cst_11 : f32 to vector<8x128xf32>
    %15 = arith.maximumf %13, %14 : vector<8x128xf32>
    %16 = arith.truncf %15 : vector<8x128xf32> to vector<8x128xbf16>
    %c0_12 = arith.constant 0 : index
    %c0_13 = arith.constant 0 : index
    %17 = vector.load %arg6[%c0_12, %c0_13] : memref<128x16xbf16, #tpu.memory_space<vmem>>, vector<128x16xbf16>
    %cst_14 = arith.constant dense<0.000000e+00> : vector<8x16xf32>
    %18 = tpu.matmul %16, %17, %cst_14 {dimension_numbers = #tpu.dot_dimension_numbers<[1], [0], [0], [1], [0, 0, 1, 1], [], []>} : vector<8x128xbf16>, vector<128x16xbf16>, vector<8x16xf32> -> vector<8x16xf32>
    %c0_15 = arith.constant 0 : index
    %c0_16 = arith.constant 0 : index
    %19 = vector.load %arg7[%c0_15, %c0_16] : memref<1x16xf32, #tpu.memory_space<vmem>>, vector<1x16xf32>
    %20 = vector.broadcast %19 : vector<1x16xf32> to vector<8x16xf32>
    %21 = arith.addf %18, %20 : vector<8x16xf32>
    %c0_17 = arith.constant 0 : index
    %c0_18 = arith.constant 0 : index
    %22 = vector.load %arg8[%c0_17, %c0_18] : memref<8x16xf32, #tpu.memory_space<vmem>>, vector<8x16xf32>
    tpu.vector_store %arg8[%c0_17, %c0_18], %21 {strides = array<i32>} : memref<8x16xf32, #tpu.memory_space<vmem>>, vector<8x16xf32>,
    return
  }
  func.func @transform_0(%arg0: i32) -> (i32, i32) {
    %c0_i32 = arith.constant 0 : i32
    %c0_i32_0 = arith.constant 0 : i32
    return %arg0, %c0_i32 : i32, i32
  }
  func.func @transform_1(%arg0: i32) -> (i32, i32) {
    %c0_i32 = arith.constant 0 : i32
    %c0_i32_0 = arith.constant 0 : i32
    %c0_i32_1 = arith.constant 0 : i32
    return %c0_i32, %c0_i32_0 : i32, i32
  }
  func.func @transform_2(%arg0: i32) -> (i32, i32) {
    %c0_i32 = arith.constant 0 : i32
    %c0_i32_0 = arith.constant 0 : i32
    %c0_i32_1 = arith.constant 0 : i32
    return %c0_i32, %c0_i32_0 : i32, i32
  }
  func.func @transform_3(%arg0: i32) -> (i32, i32) {
    %c0_i32 = arith.constant 0 : i32
    %c0_i32_0 = arith.constant 0 : i32
    %c0_i32_1 = arith.constant 0 : i32
    return %c0_i32, %c0_i32_0 : i32, i32
  }
  func.func @transform_4(%arg0: i32) -> (i32, i32) {
    %c0_i32 = arith.constant 0 : i32
    %c0_i32_0 = arith.constant 0 : i32
    %c0_i32_1 = arith.constant 0 : i32
    return %c0_i32, %c0_i32_0 : i32, i32
  }
  func.func @transform_5(%arg0: i32) -> (i32, i32) {
    %c0_i32 = arith.constant 0 : i32
    %c0_i32_0 = arith.constant 0 : i32
    %c0_i32_1 = arith.constant 0 : i32
    return %c0_i32, %c0_i32_0 : i32, i32
  }
  func.func @transform_6(%arg0: i32) -> (i32, i32) {
    %c0_i32 = arith.constant 0 : i32
    %c0_i32_0 = arith.constant 0 : i32
    %c0_i32_1 = arith.constant 0 : i32
    return %c0_i32, %c0_i32_0 : i32, i32
  }
  func.func @transform_7(%arg0: i32) -> (i32, i32) {
    %c0_i32 = arith.constant 0 : i32
    %c0_i32_0 = arith.constant 0 : i32
    return %arg0, %c0_i32 : i32, i32
  }
}

</mosaic_0001>

<llo_original>
// kernel: linearnet_forward.1
$region0: #{linearnet_forward.1}
  #allocation0 [shape = 'u32[]', space=smem, size = 0x4, offset = 0x4, fixed_abs, tag = 'smem constant byte address 0x4 - core index']
  #allocation1 [shape = 'u32[72,128]{1,0:T(1,128)}', space=vmem, size = 0x9000, scoped, tag = 'internal scratch']
  %s0 = inlined_call_operand.vmem [shape: bf16[8,32], index: 0, kind: input, shape index: {}]
  %s1 = inlined_call_operand.hbm [shape: bf16[32,128], index: 1, kind: input, shape index: {}]
  %s2 = inlined_call_operand.vmem [shape: f32[1,128], index: 2, kind: input, shape index: {}]
  %s3 = inlined_call_operand.vmem [shape: bf16[128,128], index: 3, kind: input, shape index: {}]
  %s4 = inlined_call_operand.vmem [shape: f32[1,128], index: 4, kind: input, shape index: {}]
  %s5 = inlined_call_operand.vmem [shape: bf16[128,16], index: 5, kind: input, shape index: {}]
  %s6 = inlined_call_operand.vmem [shape: f32[1,16], index: 6, kind: input, shape index: {}]
  %s7 = inlined_call_operand.hbm [shape: f32[8,16], index: 7, kind: output, shape index: {}]
  %s8 = sld [smem:[#allocation0]]
  $region42: #{linearnet_forward.1} parent=0
    _
  %s10 = ssub.s32 1, %s8
  %s11 = scalar_select 0, %s10, %s8
  $region1: #{linearnet_forward.1} parent=0
    #allocation2 [shape = 'u8[8192]{0}', space=vmem, size = 0x2000, scoped, tag = 'input window, operand 1, single buffered']
    #allocation3 [shape = 's32[1]{0}', space=sflag, size = 0x4, scoped, tag = 'scoped memory for linearnet_forward.1']
    #allocation4 [shape = 's32[1]{0}', space=sflag, size = 0x4, scoped, tag = 'scoped memory for linearnet_forward.1']
    #allocation5 [shape = 'u8[4096]{0}', space=vmem, size = 0x1000, scoped, tag = 'output window, operand 0, single buffered']
    %12 = vsyncpa [#allocation3], 0
    %13 = vsyncpa [#allocation4], 0
    // Predicated region
    $region2: #{linearnet_forward.1} parent=1 // pred_check
      _
    $region3: #{linearnet_forward.1} parent=1 // pred_check_branch
      %15 = sbr.rel (0) target = $region5
    $region4: #{linearnet_forward.1} parent=1 // pred_region
      _
    $region5: #{linearnet_forward.1} parent=1 // pred_fallthru
      _
    // Predicated region
    $region6: #{linearnet_forward.1} parent=1 // pred_check
      _
    $region7: #{linearnet_forward.1} parent=1 // pred_check_branch
      %17 = sbr.rel (0) target = $region9
    $region8: #{linearnet_forward.1} parent=1 // pred_region
      %19 = vsyncadd [#allocation3], 0
      %s20 = sshll.u32 %s1, 4
      %s21 = int_to_ptr.hbm [resolvable:$true] %s20
      %s22 = sshll.u32 [#allocation2], 4
      %s23 = int_to_ptr.vmem [resolvable:$true] %s22
      %28 = dma.hbm_to_vmem [thread:$0]  %s21, 256, %s23, [#allocation3], 64, 64, 4
    $region9: #{linearnet_forward.1} parent=1 // pred_fallthru
      _
    // Predicated region
    $region10: #{linearnet_forward.1} parent=1 // pred_check
      _
    $region11: #{linearnet_forward.1} parent=1 // pred_check_branch
      %30 = sbr.rel (0) target = $region13
    $region12: #{linearnet_forward.1} parent=1 // pred_region
      _
    $region13: #{linearnet_forward.1} parent=1 // pred_fallthru
      _
    // Predicated region
    $region14: #{linearnet_forward.1} parent=1 // pred_check
      _
    $region15: #{linearnet_forward.1} parent=1 // pred_check_branch
      %32 = sbr.rel (0) target = $region17
    $region16: #{linearnet_forward.1} parent=1 // pred_region
      _
    $region17: #{linearnet_forward.1} parent=1 // pred_fallthru
      _
    // Predicated region
    $region18: #{linearnet_forward.1} parent=1 // pred_check
      _
    $region19: #{linearnet_forward.1} parent=1 // pred_check_branch
      %34 = sbr.rel (0) target = $region21
    $region20: #{linearnet_forward.1} parent=1 // pred_region
      _
    $region21: #{linearnet_forward.1} parent=1 // pred_fallthru
      _
    // Predicated region
    $region22: #{linearnet_forward.1} parent=1 // pred_check
      _
    $region23: #{linearnet_forward.1} parent=1 // pred_check_branch
      %36 = sbr.rel (0) target = $region25
    $region24: #{linearnet_forward.1} parent=1 // pred_region
      _
    $region25: #{linearnet_forward.1} parent=1 // pred_fallthru
      _
    // Predicated region
    $region26: #{linearnet_forward.1} parent=1 // pred_check
      _
    $region27: #{linearnet_forward.1} parent=1 // pred_check_branch
      %38 = sbr.rel (0) target = $region29
    $region28: #{linearnet_forward.1} parent=1 // pred_region
      _
    $region29: #{linearnet_forward.1} parent=1 // pred_fallthru
      _
    // Predicated region
    $region30: #{linearnet_forward.1} parent=1 // pred_check
      _
    $region31: #{linearnet_forward.1} parent=1 // pred_check_branch
      %40 = sbr.rel (0) target = $region33
    $region32: #{linearnet_forward.1} parent=1 // pred_region
      %42 = dma.done [#allocation3], 256
    $region33: #{linearnet_forward.1} parent=1 // pred_fallthru
      _
    %v44 = vld [vmem:[%s0] sm:$0xf]
    %v45 = vld [vmem:[#allocation2] sm:$0xf]
    %v46 = vld [vmem:[#allocation2 + $0x4] sm:$0xf]
    %v47 = vld [vmem:[#allocation2 + $0x8] sm:$0xf]
    %v48 = vld [vmem:[#allocation2 + $0xc] sm:$0xf]
    %v49 = vld [vmem:[%s2] sm:$0x1]
    %v51 = vperm.slane %v49, 0
    %v57 = vunpack.c.l.b16 %v45
    %v58 = vunpack.c.l.b16 %v46
    %v59 = vunpack.c.l.b16 %v47
    %v60 = vunpack.c.l.b16 %v48
    %v61 = vpack.c.b16 %v58, %v57
    %v62 = vpack.c.b16 %v60, %v59
    %vm65 = vcmask 261120
    %v67 = vsel %vm65, %v44, 0
    %69 = vmatpush.bf16.msra.mxu0 0
    %70 = vmatpush.bf16.msra.mxu0 0
    %71 = vmatpush.bf16.msra.mxu0 0
    %72 = vmatpush.bf16.msra.mxu0 0
    %73 = vmatpush.bf16.msra.mxu0 0
    %74 = vmatpush.bf16.msra.mxu0 0
    %75 = vmatpush.bf16.msra.mxu0 %v62
    %76 = vmatpush.bf16.msra.mxu0 %v61
    %77 = vmatmul.bf16.gmra.mxu0 %v67
    %v78 = vpop.f32.mrf.mxu0
    %v79 = vadd.f32 %v51, %v78
    %v80 = vpop.f32.mrf.mxu0
    %81 = vdwg.mxu0
    %v82 = vmax.f32 %v79, 0.0
    %v83 = vpack.c.bf16 %v82, %v82
    %v84 = vld [vmem:[%s3] sm:$0xf]
    %v85 = vld [vmem:[%s3 + $0x4] sm:$0xf]
    %v86 = vld [vmem:[%s3 + $0x8] sm:$0xf]
    %v87 = vld [vmem:[%s3 + $0xc] sm:$0xf]
    %v88 = vld [vmem:[%s3 + $0x10] sm:$0xf]
    %v89 = vld [vmem:[%s3 + $0x14] sm:$0xf]
    %v90 = vld [vmem:[%s3 + $0x18] sm:$0xf]
    %v91 = vld [vmem:[%s3 + $0x1c] sm:$0xf]
    %v92 = vld [vmem:[%s3 + $0x20] sm:$0xf]
    %v93 = vld [vmem:[%s3 + $0x24] sm:$0xf]
    %v94 = vld [vmem:[%s3 + $0x28] sm:$0xf]
    %v95 = vld [vmem:[%s3 + $0x2c] sm:$0xf]
    %v96 = vld [vmem:[%s3 + $0x30] sm:$0xf]
    %v97 = vld [vmem:[%s3 + $0x34] sm:$0xf]
    %v98 = vld [vmem:[%s3 + $0x38] sm:$0xf]
    %v99 = vld [vmem:[%s3 + $0x3c] sm:$0xf]
    %v100 = vld [vmem:[%s4] sm:$0x1]
    %v102 = vperm.slane %v100, 0
    %v120 = vunpack.c.l.b16 %v84
    %v121 = vunpack.c.l.b16 %v85
    %v122 = vunpack.c.l.b16 %v86
    %v123 = vunpack.c.l.b16 %v87
    %v124 = vunpack.c.l.b16 %v88
    %v125 = vunpack.c.l.b16 %v89
    %v126 = vunpack.c.l.b16 %v90
    %v127 = vunpack.c.l.b16 %v91
    %v128 = vunpack.c.l.b16 %v92
    %v129 = vunpack.c.l.b16 %v93
    %v130 = vunpack.c.l.b16 %v94
    %v131 = vunpack.c.l.b16 %v95
    %v132 = vunpack.c.l.b16 %v96
    %v133 = vunpack.c.l.b16 %v97
    %v134 = vunpack.c.l.b16 %v98
    %v135 = vunpack.c.l.b16 %v99
    %v136 = vpack.c.b16 %v121, %v120
    %v137 = vpack.c.b16 %v123, %v122
    %v138 = vpack.c.b16 %v125, %v124
    %v139 = vpack.c.b16 %v127, %v126
    %v140 = vpack.c.b16 %v129, %v128
    %v141 = vpack.c.b16 %v131, %v130
    %v142 = vpack.c.b16 %v133, %v132
    %v143 = vpack.c.b16 %v135, %v134
    %152 = vmatpush.bf16.msra.mxu0 %v143
    %153 = vmatpush.bf16.msra.mxu0 %v142
    %154 = vmatpush.bf16.msra.mxu0 %v141
    %155 = vmatpush.bf16.msra.mxu0 %v140
    %156 = vmatpush.bf16.msra.mxu0 %v139
    %157 = vmatpush.bf16.msra.mxu0 %v138
    %158 = vmatpush.bf16.msra.mxu0 %v137
    %159 = vmatpush.bf16.msra.mxu0 %v136
    %160 = vmatmul.bf16.gmra.mxu0 %v83
    %v161 = vpop.f32.mrf.mxu0
    %v162 = vadd.f32 %v102, %v161
    %v163 = vpop.f32.mrf.mxu0
    %164 = vdwg.mxu0
    %v165 = vmax.f32 %v162, 0.0
    %v166 = vpack.c.bf16 %v165, %v165
    %v167 = vld [vmem:[%s5] sm:$0xf]
    %v168 = vld [vmem:[%s5 + $0x4] sm:$0xf]
    %v169 = vld [vmem:[%s5 + $0x8] sm:$0xf]
    %v170 = vld [vmem:[%s5 + $0xc] sm:$0xf]
    %v171 = vld [vmem:[%s5 + $0x10] sm:$0xf]
    %v172 = vld [vmem:[%s5 + $0x14] sm:$0xf]
    %v173 = vld [vmem:[%s5 + $0x18] sm:$0xf]
    %v174 = vld [vmem:[%s5 + $0x1c] sm:$0xf]
    %v175 = vld [vmem:[%s5 + $0x20] sm:$0xf]
    %v176 = vld [vmem:[%s5 + $0x24] sm:$0xf]
    %v177 = vld [vmem:[%s5 + $0x28] sm:$0xf]
    %v178 = vld [vmem:[%s5 + $0x2c] sm:$0xf]
    %v179 = vld [vmem:[%s5 + $0x30] sm:$0xf]
    %v180 = vld [vmem:[%s5 + $0x34] sm:$0xf]
    %v181 = vld [vmem:[%s5 + $0x38] sm:$0xf]
    %v182 = vld [vmem:[%s5 + $0x3c] sm:$0xf]
    %v183 = vld [vmem:[%s6] sm:$0x1]
    %v185 = vperm.slane %v183, 0
    %v203 = vunpack.c.l.b16 %v167
    %v204 = vunpack.c.l.b16 %v168
    %v205 = vunpack.c.l.b16 %v169
    %v206 = vunpack.c.l.b16 %v170
    %v207 = vunpack.c.l.b16 %v171
    %v208 = vunpack.c.l.b16 %v172
    %v209 = vunpack.c.l.b16 %v173
    %v210 = vunpack.c.l.b16 %v174
    %v211 = vunpack.c.l.b16 %v175
    %v212 = vunpack.c.l.b16 %v176
    %v213 = vunpack.c.l.b16 %v177
    %v214 = vunpack.c.l.b16 %v178
    %v215 = vunpack.c.l.b16 %v179
    %v216 = vunpack.c.l.b16 %v180
    %v217 = vunpack.c.l.b16 %v181
    %v218 = vunpack.c.l.b16 %v182
    %v219 = vpack.c.b16 %v204, %v203
    %v220 = vpack.c.b16 %v206, %v205
    %v221 = vpack.c.b16 %v208, %v207
    %v222 = vpack.c.b16 %v210, %v209
    %v223 = vpack.c.b16 %v212, %v211
    %v224 = vpack.c.b16 %v214, %v213
    %v225 = vpack.c.b16 %v216, %v215
    %v226 = vpack.c.b16 %v218, %v217
    %235 = vmatpush.bf16.msra.mxu0 %v226
    %236 = vmatpush.bf16.msra.mxu0 %v225
    %237 = vmatpush.bf16.msra.mxu0 %v224
    %238 = vmatpush.bf16.msra.mxu0 %v223
    %239 = vmatpush.bf16.msra.mxu0 %v222
    %240 = vmatpush.bf16.msra.mxu0 %v221
    %241 = vmatpush.bf16.msra.mxu0 %v220
    %242 = vmatpush.bf16.msra.mxu0 %v219
    %243 = vmatmul.bf16.gmra.mxu0 %v166
    %v244 = vpop.f32.mrf.mxu0
    %v245 = vadd.f32 %v185, %v244
    %v246 = vpop.f32.mrf.mxu0
    %247 = vdwg.mxu0
    %vm248 = vcmask 130048
    %249 = vst.msk [vmem:[#allocation5] sm:$0xff] %vm248, %v245
    // Predicated region
    $region34: #{linearnet_forward.1} parent=1 // pred_check
      _
    $region35: #{linearnet_forward.1} parent=1 // pred_check_branch
      %251 = sbr.rel (0) target = $region37
    $region36: #{linearnet_forward.1} parent=1 // pred_region
      %253 = vsyncadd [#allocation4], 0
      %s255 = sshll.u32 [#allocation5], 4
      %s256 = int_to_ptr.vmem [resolvable:$true] %s255
      %s257 = sshll.u32 %s7, 4
      %s258 = int_to_ptr.hbm [resolvable:$true] %s257
      %260 = dma.vmem_to_hbm [thread:$0]  %s256, 128, %s258, [#allocation4]
    $region37: #{linearnet_forward.1} parent=1 // pred_fallthru
      _
    // Predicated region
    $region38: #{linearnet_forward.1} parent=1 // pred_check
      _
    $region39: #{linearnet_forward.1} parent=1 // pred_check_branch
      %262 = sbr.rel (0) target = $region41
    $region40: #{linearnet_forward.1} parent=1 // pred_region
      %264 = dma.done [#allocation4], 128
    $region41: #{linearnet_forward.1} parent=1 // pred_fallthru
      _
    %265 = vsyncpa [#allocation3], 1
    %266 = vsyncpa [#allocation4], 1

</llo_original>
